<compile_context>
chip_gen: v5e
topology: v5e:2x2
jax: 0.10.0
libtpu: 0.0.40
codegen_flags: <defaults>
</compile_context>

<pallas_src>
import math
import functools

import jax
import jax.numpy as jnp
from jax import lax
from jax.experimental import pallas as pl
from jax.experimental.pallas import tpu as pltpu

BASE_LOG = 2  # as in lossyless


# ----------------------------------------------------------------------------
# Pallas kernel: projector MLP + cosine-sim InfoNCE, Q problems per grid step
# ----------------------------------------------------------------------------
def _contrastive_kernel(inv_temp_ref,  # SMEM (1,)      : clamp(exp(logit_scale), 1/temp_min)
                        z_hat_ref,     # VMEM (Q,B,D)
                        x_pos_ref,     # VMEM (Q,B,D)   (already featurized positives)
                        w1_ref,        # VMEM (D,H)     resident across grid steps
                        b1_ref,        # VMEM (1,H)
                        w2_ref,        # VMEM (H,Do)    resident across grid steps
                        b2_ref,        # VMEM (1,Do)
                        out_ref,       # VMEM (Q,1,B)   : averaged hat_H_m|z, lane-dense
                        *, gram_bf16):
    q, b, d = z_hat_ref.shape
    n2 = 2 * b
    inv_temp = inv_temp_ref[0]

    # cat([z_hat, z_pos_hat], dim=0) per problem -> (Q, 2B, D), done in VMEM.
    zs = jnp.concatenate([z_hat_ref[...], x_pos_ref[...]], axis=1)

    # --- projector MLP (D -> H -> Do, ReLU hidden), fused over the Q problems ------
    # One GEMM with M = Q*2B rows instead of Q small M=2B matmuls (MXU occupancy).
    w1 = w1_ref[...]
    w2 = w2_ref[...]
    mm_in = zs.reshape(q * n2, d).astype(w1.dtype)           # cast is a no-op in f32 path
    h = jnp.dot(mm_in, w1, preferred_element_type=jnp.float32) + b1_ref[...]
    h = jnp.maximum(h, 0.0)
    z = jnp.dot(h.astype(w2.dtype), w2, preferred_element_type=jnp.float32) + b2_ref[...]
    d_out = z.shape[-1]
    z = z.reshape(q, n2, d_out)                               # (Q, 2B, Do) f32

    # --- fused L2 normalization + temperature --------------------------------------
    # F.normalize(p=2, eps=1e-12) followed by logits/temperature is folded into one
    # scale applied once: z_s = z * sqrt(inv_temp) * rsqrt(max(||z||^2, eps^2)).
    sq = jnp.sum(z * z, axis=-1, keepdims=True)               # (Q, 2B, 1)
    scale = jnp.sqrt(inv_temp) * lax.rsqrt(jnp.maximum(sq, 1e-24))
    z_s = z * scale                                           # (Q, 2B, Do) f32

    gram_dtype = jnp.bfloat16 if gram_bf16 else jnp.float32
    zq = z_s.astype(gram_dtype)                               # single cast, both operands
    zq_f32 = zq.astype(jnp.float32)                           # exact widening

    # Positive logit, computed from the *same rounded operands* as the gram matmul
    # (consistent with the in-LSE positive term): pos[j] = <z_s_j, z_s_{j+b}>.
    pos = jnp.sum(zq_f32[:, :b, :] * zq_f32[:, b:, :], axis=-1)          # (Q, B)

    # Diagonal of the gram matrix (== inv_temp up to operand rounding), recomputed in
    # O(2B*Do) instead of extracting it with a (2B,2B) mask.
    diag = jnp.sum(zq_f32 * zq_f32, axis=-1, keepdims=True)              # (Q, 2B, 1)

    # --- per-problem gram logits via batched NT contraction (MXU) -------------------
    logits = jnp.einsum('qnd,qmd->qnm', zq, zq,
                        preferred_element_type=jnp.float32)              # (Q, 2B, 2B)

    # --- mask-free diagonal-excluded logsumexp --------------------------------------
    # Rows are unit-norm so the diagonal (== inv_temp) is the row maximum; use it as
    # the LSE shift (no row-max reduce, no iota/where mask) and subtract the diagonal
    # contribution. Clamp guards the cancellation regime where all off-diagonal
    # similarities are strongly negative at large inv_temp.
    exp_row = jnp.exp(logits - inv_temp)
    sum_exp = jnp.sum(exp_row, axis=-1, keepdims=True)                   # (Q, 2B, 1)
    sum_masked = jnp.maximum(sum_exp - jnp.exp(diag - inv_temp), 1e-30)
    lse = inv_temp + jnp.log(sum_masked)                                 # (Q, 2B, 1)

    # forward(): (hat_H_mlz[:B] + hat_H_mlz[B:]) / 2 == 0.5*(lse_j + lse_{j+b}) - pos_j
    res = 0.5 * (lse[:, :b, 0] + lse[:, b:, 0]) - pos                    # (Q, B)
    out_ref[...] = res[:, None, :]                                       # (Q, 1, B)


# ----------------------------------------------------------------------------
# Wrapper
# ----------------------------------------------------------------------------
@functools.partial(jax.jit, static_argnames=("temperature_min", "gram_bf16",
                                             "projector_bf16", "probs_per_step"))
def contrastive_distortion(z_hat, x_pos, params, *, temperature_min=0.01,
                           gram_bf16=True, projector_bf16=False, probs_per_step=None):
    """Pallas implementation of ContrastiveDistortion.forward.

    z_hat : (B, D) or (P, B, D) reconstructed representations
    x_pos : same shape, positive examples (already featurized)
    Returns (hat_H_mlz [B] or [P, B], logs dict).
    """
    squeeze = (z_hat.ndim == 2)
    if squeeze:
        z_hat = z_hat[None]
        x_pos = x_pos[None]
    P, B, D = z_hat.shape
    n2 = 2 * B

    if n2 > 1024:
        # TODO(synk): flash-style column-tiled LSE for large 2B (see header); the
        #             single-block gram would not fit VMEM (64 MiB on v7x).
        raise NotImplementedError("single-block kernel sized for 2B <= 1024")
    if B % 8 != 0 or D % 128 != 0:
        raise NotImplementedError("B must be a multiple of 8 and D of 128 (pad inputs)")

    H = params["w1"].shape[1]
    DOUT = params["w2"].shape[1]
    if H % 128 != 0 or DOUT % 128 != 0:
        raise NotImplementedError("projector hidden/out dims must be multiples of 128")

    # Problems per grid step: fuse enough problems for a >=128/256-row projector GEMM
    # while bounding the per-step (Q, 2B, 2B) gram footprint.
    if probs_per_step is None:
        q = P
        while q > 1 and (q * n2 > 512 or P % q != 0):
            q -= 1
    else:
        q = int(probs_per_step)
    assert P % q == 0, "probs_per_step must divide the number of problems"
    G = P // q

    # Temperature (CLIP-style trainable logit scale, clamped at 1/temperature_min).
    inv_temp = jnp.minimum(jnp.exp(params["logit_scale"]),
                           1.0 / temperature_min).reshape(1).astype(jnp.float32)

    # Pre-cast projector weights in the wrapper (halves weight DMA in the bf16 path,
    # removes in-kernel cast passes). Biases stay f32 (added post f32-accumulation).
    proj_dtype = jnp.bfloat16 if projector_bf16 else jnp.float32
    w1 = params["w1"].astype(proj_dtype)
    w2 = params["w2"].astype(proj_dtype)
    b1 = params["b1"].astype(jnp.float32).reshape(1, H)
    b2 = params["b2"].astype(jnp.float32).reshape(1, DOUT)

    # Explicit VMEM budget (defaults are 32 MiB scoped on all generations).
    w_bytes = (D * H + H * DOUT) * w1.dtype.itemsize + (H + DOUT) * 4
    io_bytes = 2 * 2 * (q * B * D * 4) + 2 * (q * B * 4)        # double-buffered in/out
    act_bytes = 4 * q * n2 * (D + H + DOUT) * 2
    gram_bytes = 4 * q * n2 * n2 * 3
    vmem_limit = int(min(64 * 2**20,
                         max(32 * 2**20, w_bytes + io_bytes + act_bytes + gram_bytes
                             + (4 << 20))))

    grid_spec = pltpu.PrefetchScalarGridSpec(
        num_scalar_prefetch=1,               # inv_temp lands in SMEM
        grid=(G,),
        in_specs=[
            pl.BlockSpec((q, B, D), lambda g, it: (g, 0, 0)),    # z_hat block
            pl.BlockSpec((q, B, D), lambda g, it: (g, 0, 0)),    # x_pos block
            pl.BlockSpec((D, H),    lambda g, it: (0, 0)),       # w1 (resident, no re-DMA)
            pl.BlockSpec((1, H),    lambda g, it: (0, 0)),       # b1 (resident)
            pl.BlockSpec((H, DOUT), lambda g, it: (0, 0)),       # w2 (resident)
            pl.BlockSpec((1, DOUT), lambda g, it: (0, 0)),       # b2 (resident)
        ],
        out_specs=pl.BlockSpec((q, 1, B), lambda g, it: (g, 0, 0)),   # lane-dense slab
    )

    out = pl.pallas_call(
        functools.partial(_contrastive_kernel, gram_bf16=gram_bf16),
        out_shape=jax.ShapeDtypeStruct((P, 1, B), jnp.float32),
        grid_spec=grid_spec,
        compiler_params=pltpu.CompilerParams(
            dimension_semantics=("parallel",),      # shards problem groups on v7x's 2 TCs
            vmem_limit_bytes=vmem_limit),
    )(inv_temp,
      z_hat.astype(jnp.float32), x_pos.astype(jnp.float32),
      w1, b1, w2, b2)

    hat_h_mlz = out[:, 0, :]                                     # (P, B)

    # logs (glue; mean over averaged pairs == mean over all 2B rows)
    n_classes = n2 - 1
    hat_h_m = math.log(n_classes)                                # effective_n_classes = n_classes
    i_q_zm = (hat_h_m - jnp.mean(hat_h_mlz, axis=-1)) / math.log(BASE_LOG)   # per problem
    if squeeze:
        hat_h_mlz = hat_h_mlz[0]
        i_q_zm = i_q_zm[0]
    logs = dict(I_q_zm=i_q_zm, hat_H_m=hat_h_m / math.log(BASE_LOG),
                n_negatives=n_classes)
    return hat_h_mlz, logs


# ----------------------------------------------------------------------------
# Pure-JAX reference (mirrors the PyTorch f32 semantics)
# ----------------------------------------------------------------------------
def reference(z_hat, x_pos, params, temperature_min=0.01):
    def one(zh, xp):
        B = zh.shape[0]
        zs_in = jnp.concatenate([zh, xp], axis=0)
        h = jnp.maximum(zs_in @ params["w1"] + params["b1"], 0.0)
        z = h @ params["w2"] + params["b2"]
        z = z / jnp.maximum(jnp.linalg.norm(z, axis=1, keepdims=True), 1e-12)
        inv_t = jnp.minimum(jnp.exp(params["logit_scale"]), 1.0 / temperature_min)
        logits = (z @ z.T) * inv_t
        n2 = 2 * B
        eye = jnp.eye(n2, dtype=bool)
        masked = jnp.where(eye, -jnp.inf, logits)
        pos_col = jnp.concatenate([jnp.arange(B) + B, jnp.arange(B)])
        pos_logit = logits[jnp.arange(n2), pos_col]
        lse = jax.scipy.special.logsumexp(masked, axis=1)
        hat = lse - pos_logit
        return 0.5 * (hat[:B] + hat[B:])

    if z_hat.ndim == 2:
        return one(z_hat, x_pos)
    return jax.vmap(one)(z_hat, x_pos)


# ----------------------------------------------------------------------------
# Main
# ----------------------------------------------------------------------------
if __name__ == "__main__":
    # z_dim = in_shape = 128, MLP projector 128 -> 128 -> 128; P microbatch problems
    # stacked into one pallas_call (grid over problem groups, weights resident).
    P, B, D, H, DOUT = 8, 8, 128, 128, 128

    key = jax.random.PRNGKey(0)
    k_z, k_pos, k_w1, k_b1, k_w2, k_b2 = jax.random.split(key, 6)

    z_hat = jax.random.normal(k_z, (P, B, D), dtype=jnp.float32)
    # x_pos: positives on the same orbit, already featurized (is_already_featurized=True)
    # TODO(synk): the is_already_featurized=False branch calls parent(x_pos, is_features=True),
    #             an external encoder not part of this module; not reproduced here.
    x_pos = z_hat + 0.05 * jax.random.normal(k_pos, (P, B, D), dtype=jnp.float32)

    params = {
        "w1": jax.random.normal(k_w1, (D, H), dtype=jnp.float32) * math.sqrt(2.0 / D),
        "b1": 0.01 * jax.random.normal(k_b1, (1, H), dtype=jnp.float32),
        "w2": jax.random.normal(k_w2, (H, DOUT), dtype=jnp.float32) * math.sqrt(2.0 / H),
        "b2": 0.01 * jax.random.normal(k_b2, (1, DOUT), dtype=jnp.float32),
        # CLIP-style trainable temperature: logit_scale = log(1/0.07)
        "logit_scale": jnp.float32(math.log(1.0 / 0.07)),
    }

    ref = reference(z_hat, x_pos, params)

    # Exact f32 path, multi-step grid (probs_per_step=2 -> grid=(4,), resident weights).
    out_f32, logs = contrastive_distortion(z_hat, x_pos, params,
                                           gram_bf16=False, projector_bf16=False,
                                           probs_per_step=2)
    out_f32 = jax.block_until_ready(out_f32)
    assert out_f32.shape == (P, B), out_f32.shape
    assert jnp.allclose(out_f32, ref, atol=3e-4, rtol=3e-4), (out_f32, ref)

    # Default fast path: bf16 gram matmul (f32 accumulation), f32 projector, auto Q.
    out_fast, _ = contrastive_distortion(z_hat, x_pos, params)
    out_fast = jax.block_until_ready(out_fast)
    assert out_fast.shape == (P, B), out_fast.shape
    assert jnp.allclose(out_fast, ref, atol=0.25, rtol=0.05), (out_fast, ref)

    # Fully bf16 MXU path (pre-cast weights in the wrapper); loose smoke tolerance.
    out_bf16, _ = contrastive_distortion(z_hat, x_pos, params, projector_bf16=True)
    out_bf16 = jax.block_until_ready(out_bf16)
    assert jnp.allclose(out_bf16, ref, atol=0.6, rtol=0.25), (out_bf16, ref)

    # Single-problem (B, D) API still works (grid=(1,)).
    out1, _ = contrastive_distortion(z_hat[0], x_pos[0], params, gram_bf16=False)
    out1 = jax.block_until_ready(out1)
    assert out1.shape == (B,), out1.shape
    assert jnp.allclose(out1, ref[0], atol=3e-4, rtol=3e-4), (out1, ref[0])

    print("KERNEL_OK")
</pallas_src>

<mosaic_0001>
module attributes {stable_mosaic.version = 11 : i64} {
  func.func @_contrastive_kernel(%arg0: i32, %arg1: memref<1xf32, #tpu.memory_space<smem>>, %arg2: memref<2x8x128xf32, #tpu.memory_space<vmem>>, %arg3: memref<2x8x128xf32, #tpu.memory_space<vmem>>, %arg4: memref<128x128xf32, #tpu.memory_space<vmem>>, %arg5: memref<1x128xf32, #tpu.memory_space<vmem>>, %arg6: memref<128x128xf32, #tpu.memory_space<vmem>>, %arg7: memref<1x128xf32, #tpu.memory_space<vmem>>, %arg8: memref<2x1x8xf32, #tpu.memory_space<vmem>>) attributes {dimension_semantics = [#tpu.dimension_semantics<parallel>], iteration_bounds = array<i64: 4>, scalar_prefetch = 1 : i64, scratch_operands = 0 : i64, tpu.core_type = #tpu.core_type<tc>, window_params = [{transform_indices = @transform_0, window_bounds = array<i64: 2, 8, 128>}, {transform_indices = @transform_1, window_bounds = array<i64: 2, 8, 128>}, {pipeline_mode = #tpu.pipeline_mode<synchronous>, transform_indices = @transform_2, window_bounds = array<i64: 128, 128>}, {pipeline_mode = #tpu.pipeline_mode<synchronous>, transform_indices = @transform_3, window_bounds = array<i64: 1, 128>}, {pipeline_mode = #tpu.pipeline_mode<synchronous>, transform_indices = @transform_4, window_bounds = array<i64: 128, 128>}, {pipeline_mode = #tpu.pipeline_mode<synchronous>, transform_indices = @transform_5, window_bounds = array<i64: 1, 128>}, {transform_indices = @transform_6, window_bounds = array<i64: 2, 1, 8>}]} {
    %c0 = arith.constant 0 : index
    %0 = memref.load %arg1[%c0] : memref<1xf32, #tpu.memory_space<smem>>
    %c0_0 = arith.constant 0 : index
    %c0_1 = arith.constant 0 : index
    %c0_2 = arith.constant 0 : index
    %1 = vector.load %arg2[%c0_0, %c0_1, %c0_2] : memref<2x8x128xf32, #tpu.memory_space<vmem>>, vector<2x8x128xf32>
    %c0_3 = arith.constant 0 : index
    %c0_4 = arith.constant 0 : index
    %c0_5 = arith.constant 0 : index
    %2 = vector.load %arg3[%c0_3, %c0_4, %c0_5] : memref<2x8x128xf32, #tpu.memory_space<vmem>>, vector<2x8x128xf32>
    %3 = tpu.concatenate %1, %2 in 1 : vector<2x8x128xf32>, vector<2x8x128xf32> -> vector<2x16x128xf32>
    %c0_6 = arith.constant 0 : index
    %c0_7 = arith.constant 0 : index
    %4 = vector.load %arg4[%c0_6, %c0_7] : memref<128x128xf32, #tpu.memory_space<vmem>>, vector<128x128xf32>
    %c0_8 = arith.constant 0 : index
    %c0_9 = arith.constant 0 : index
    %5 = vector.load %arg6[%c0_8, %c0_9] : memref<128x128xf32, #tpu.memory_space<vmem>>, vector<128x128xf32>
    %6 = vector.shape_cast %3 : vector<2x16x128xf32> to vector<32x128xf32>
    %cst = arith.constant dense<0.000000e+00> : vector<32x128xf32>
    %7 = tpu.matmul %6, %4, %cst {dimension_numbers = #tpu.dot_dimension_numbers<[1], [0], [0], [1], [0, 0, 1, 1], [], []>} : vector<32x128xf32>, vector<128x128xf32>, vector<32x128xf32> -> vector<32x128xf32>
    %c0_10 = arith.constant 0 : index
    %c0_11 = arith.constant 0 : index
    %8 = vector.load %arg5[%c0_10, %c0_11] : memref<1x128xf32, #tpu.memory_space<vmem>>, vector<1x128xf32>
    %9 = vector.broadcast %8 : vector<1x128xf32> to vector<32x128xf32>
    %10 = arith.addf %7, %9 : vector<32x128xf32>
    %cst_12 = arith.constant 0.000000e+00 : f32
    %11 = vector.broadcast %cst_12 : f32 to vector<32x128xf32>
    %12 = arith.maximumf %10, %11 : vector<32x128xf32>
    %cst_13 = arith.constant dense<0.000000e+00> : vector<32x128xf32>
    %13 = tpu.matmul %12, %5, %cst_13 {dimension_numbers = #tpu.dot_dimension_numbers<[1], [0], [0], [1], [0, 0, 1, 1], [], []>} : vector<32x128xf32>, vector<128x128xf32>, vector<32x128xf32> -> vector<32x128xf32>
    %c0_14 = arith.constant 0 : index
    %c0_15 = arith.constant 0 : index
    %14 = vector.load %arg7[%c0_14, %c0_15] : memref<1x128xf32, #tpu.memory_space<vmem>>, vector<1x128xf32>
    %15 = vector.broadcast %14 : vector<1x128xf32> to vector<32x128xf32>
    %16 = arith.addf %13, %15 : vector<32x128xf32>
    %17 = vector.shape_cast %16 : vector<32x128xf32> to vector<2x16x128xf32>
    %18 = arith.mulf %17, %17 : vector<2x16x128xf32>
    %cst_16 = arith.constant dense<0.000000e+00> : vector<2x16xf32>
    %19 = vector.multi_reduction <add>, %18, %cst_16 [2] : vector<2x16x128xf32> to vector<2x16xf32>
    %20 = vector.shape_cast %19 : vector<2x16xf32> to vector<2x16x1xf32>
    %21 = math.sqrt %0 : f32
    %cst_17 = arith.constant 1.000000e-24 : f32
    %22 = vector.broadcast %cst_17 : f32 to vector<2x16x1xf32>
    %23 = arith.maximumf %20, %22 : vector<2x16x1xf32>
    %24 = math.rsqrt %23 : vector<2x16x1xf32>
    %25 = vector.broadcast %21 : f32 to vector<2x16x1xf32>
    %26 = arith.mulf %25, %24 : vector<2x16x1xf32>
    %27 = vector.broadcast %26 : vector<2x16x1xf32> to vector<2x16x128xf32>
    %28 = arith.mulf %17, %27 : vector<2x16x128xf32>
    %29 = vector.extract_strided_slice %28 {offsets = [0, 0, 0], sizes = [2, 8, 128], strides = [1, 1, 1]} : vector<2x16x128xf32> to vector<2x8x128xf32>
    %30 = vector.extract_strided_slice %28 {offsets = [0, 8, 0], sizes = [2, 8, 128], strides = [1, 1, 1]} : vector<2x16x128xf32> to vector<2x8x128xf32>
    %31 = arith.mulf %29, %30 : vector<2x8x128xf32>
    %cst_18 = arith.constant dense<0.000000e+00> : vector<2x8xf32>
    %32 = vector.multi_reduction <add>, %31, %cst_18 [2] : vector<2x8x128xf32> to vector<2x8xf32>
    %33 = arith.mulf %28, %28 : vector<2x16x128xf32>
    %cst_19 = arith.constant dense<0.000000e+00> : vector<2x16xf32>
    %34 = vector.multi_reduction <add>, %33, %cst_19 [2] : vector<2x16x128xf32> to vector<2x16xf32>
    %35 = vector.shape_cast %34 : vector<2x16xf32> to vector<2x16x1xf32>
    "tpu.trace_start"() <{level = 10 : i32, message = "qnd,qmd->qnm"}> : () -> ()
    %cst_20 = arith.constant dense<0.000000e+00> : vector<2x16x16xf32>
    %36 = tpu.matmul %28, %28, %cst_20 {dimension_numbers = #tpu.dot_dimension_numbers<[2], [2], [1], [1], [0, 0, 0, 1, 1, 1], [0], [0]>} : vector<2x16x128xf32>, vector<2x16x128xf32>, vector<2x16x16xf32> -> vector<2x16x16xf32>
    "tpu.trace_stop"() : () -> ()
    %37 = vector.broadcast %0 : f32 to vector<2x16x16xf32>
    %38 = arith.subf %36, %37 : vector<2x16x16xf32>
    %39 = math.exp %38 : vector<2x16x16xf32>
    %cst_21 = arith.constant dense<0.000000e+00> : vector<2x16xf32>
    %40 = vector.multi_reduction <add>, %39, %cst_21 [2] : vector<2x16x16xf32> to vector<2x16xf32>
    %41 = vector.shape_cast %40 : vector<2x16xf32> to vector<2x16x1xf32>
    %42 = vector.broadcast %0 : f32 to vector<2x16x1xf32>
    %43 = arith.subf %35, %42 : vector<2x16x1xf32>
    %44 = math.exp %43 : vector<2x16x1xf32>
    %45 = arith.subf %41, %44 : vector<2x16x1xf32>
    %cst_22 = arith.constant 1.000000e-30 : f32
    %46 = vector.broadcast %cst_22 : f32 to vector<2x16x1xf32>
    %47 = arith.maximumf %45, %46 : vector<2x16x1xf32>
    %48 = math.log %47 : vector<2x16x1xf32>
    %49 = vector.broadcast %0 : f32 to vector<2x16x1xf32>
    %50 = arith.addf %49, %48 : vector<2x16x1xf32>
    %51 = vector.extract_strided_slice %50 {offsets = [0, 0, 0], sizes = [2, 8, 1], strides = [1, 1, 1]} : vector<2x16x1xf32> to vector<2x8x1xf32>
    %52 = vector.shape_cast %51 : vector<2x8x1xf32> to vector<2x8xf32>
    %53 = vector.extract_strided_slice %50 {offsets = [0, 8, 0], sizes = [2, 8, 1], strides = [1, 1, 1]} : vector<2x16x1xf32> to vector<2x8x1xf32>
    %54 = vector.shape_cast %53 : vector<2x8x1xf32> to vector<2x8xf32>
    %55 = arith.addf %52, %54 : vector<2x8xf32>
    %cst_23 = arith.constant 5.000000e-01 : f32
    %56 = vector.broadcast %cst_23 : f32 to vector<2x8xf32>
    %57 = arith.mulf %56, %55 : vector<2x8xf32>
    %58 = arith.subf %57, %32 : vector<2x8xf32>
    %59 = vector.shape_cast %58 : vector<2x8xf32> to vector<2x1x8xf32>
    %c0_24 = arith.constant 0 : index
    %c0_25 = arith.constant 0 : index
    %c0_26 = arith.constant 0 : index
    %60 = vector.load %arg8[%c0_24, %c0_25, %c0_26] : memref<2x1x8xf32, #tpu.memory_space<vmem>>, vector<2x1x8xf32>
    tpu.vector_store %arg8[%c0_24, %c0_25, %c0_26], %59 {strides = array<i32>} : memref<2x1x8xf32, #tpu.memory_space<vmem>>, vector<2x1x8xf32>,
    return
  }
  func.func @transform_0(%arg0: i32, %arg1: memref<1xf32, #tpu.memory_space<smem>>) -> (i32, i32, i32) {
    %c0_i32 = arith.constant 0 : i32
    %c0_i32_0 = arith.constant 0 : i32
    %c0_i32_1 = arith.constant 0 : i32
    return %arg0, %c0_i32, %c0_i32_0 : i32, i32, i32
  }
  func.func @transform_1(%arg0: i32, %arg1: memref<1xf32, #tpu.memory_space<smem>>) -> (i32, i32, i32) {
    %c0_i32 = arith.constant 0 : i32
    %c0_i32_0 = arith.constant 0 : i32
    %c0_i32_1 = arith.constant 0 : i32
    return %arg0, %c0_i32, %c0_i32_0 : i32, i32, i32
  }
  func.func @transform_2(%arg0: i32, %arg1: memref<1xf32, #tpu.memory_space<smem>>) -> (i32, i32) {
    %c0_i32 = arith.constant 0 : i32
    %c0_i32_0 = arith.constant 0 : i32
    %c0_i32_1 = arith.constant 0 : i32
    return %c0_i32, %c0_i32_0 : i32, i32
  }
  func.func @transform_3(%arg0: i32, %arg1: memref<1xf32, #tpu.memory_space<smem>>) -> (i32, i32) {
    %c0_i32 = arith.constant 0 : i32
    %c0_i32_0 = arith.constant 0 : i32
    %c0_i32_1 = arith.constant 0 : i32
    return %c0_i32, %c0_i32_0 : i32, i32
  }
  func.func @transform_4(%arg0: i32, %arg1: memref<1xf32, #tpu.memory_space<smem>>) -> (i32, i32) {
    %c0_i32 = arith.constant 0 : i32
    %c0_i32_0 = arith.constant 0 : i32
    %c0_i32_1 = arith.constant 0 : i32
    return %c0_i32, %c0_i32_0 : i32, i32
  }
  func.func @transform_5(%arg0: i32, %arg1: memref<1xf32, #tpu.memory_space<smem>>) -> (i32, i32) {
    %c0_i32 = arith.constant 0 : i32
    %c0_i32_0 = arith.constant 0 : i32
    %c0_i32_1 = arith.constant 0 : i32
    return %c0_i32, %c0_i32_0 : i32, i32
  }
  func.func @transform_6(%arg0: i32, %arg1: memref<1xf32, #tpu.memory_space<smem>>) -> (i32, i32, i32) {
    %c0_i32 = arith.constant 0 : i32
    %c0_i32_0 = arith.constant 0 : i32
    %c0_i32_1 = arith.constant 0 : i32
    return %arg0, %c0_i32, %c0_i32_0 : i32, i32, i32
  }
}

</mosaic_0001>

<llo_original>
// kernel: contrastive_distortion.1
$region0: #{contrastive_distortion.1}
  #allocation0 [shape = 'u32[]', space=smem, size = 0x4, offset = 0x4, fixed_abs, tag = 'smem constant byte address 0x4 - core index']
  #allocation1 [shape = 'u32[72,128]{1,0:T(1,128)}', space=vmem, size = 0x9000, scoped, tag = 'internal scratch']
  #allocation2 [shape = 's32[1]{0}', space=sflag, size = 0x4, scoped, tag = 'scoped memory for contrastive_distortion.1']
  #allocation3 [shape = 'f32[1]{0:T(128)S(6)}', space=smem, size = 0x200, scoped, tag = 'prefetched SMEM operand 0']
  %s0 = inlined_call_operand.<no memory space> [shape: f32[1], index: 0, kind: input, shape index: {}]
  %s1 = inlined_call_operand.hbm [shape: f32[8,8,128], index: 1, kind: input, shape index: {}]
  %s2 = inlined_call_operand.hbm [shape: f32[8,8,128], index: 2, kind: input, shape index: {}]
  %s3 = inlined_call_operand.hbm [shape: f32[128,128], index: 3, kind: input, shape index: {}]
  %s4 = inlined_call_operand.vmem [shape: f32[1,128], index: 4, kind: input, shape index: {}]
  %s5 = inlined_call_operand.hbm [shape: f32[128,128], index: 5, kind: input, shape index: {}]
  %s6 = inlined_call_operand.vmem [shape: f32[1,128], index: 6, kind: input, shape index: {}]
  %s7 = inlined_call_operand.vmem [shape: f32[8,1,8], index: 7, kind: output, shape index: {}]
  %s8 = sld [smem:[#allocation0]]
  $region73: #{contrastive_distortion.1} parent=0
    _
  %s10 = ssub.s32 1, %s8
  %s11 = scalar_select 0, %s10, %s8
  %12 = sst [smem:[#allocation3]] %s0
  $region1: #{contrastive_distortion.1} parent=0
    #allocation4 [shape = 'u8[16384]{0}', space=vmem, size = 0x4000, scoped, tag = 'input window, operand 1']
    #allocation5 [shape = 's32[2]{0}', space=sflag, size = 0x8, scoped, tag = 'scoped memory for contrastive_distortion.1']
    #allocation6 [shape = 'u8[16384]{0}', space=vmem, size = 0x4000, scoped, tag = 'input window, operand 2']
    #allocation7 [shape = 's32[2]{0}', space=sflag, size = 0x8, scoped, tag = 'scoped memory for contrastive_distortion.1']
    #allocation8 [shape = 'u8[65536]{0}', space=vmem, size = 0x10000, scoped, tag = 'input window, operand 3, single buffered']
    #allocation9 [shape = 'u8[65536]{0}', space=vmem, size = 0x10000, scoped, tag = 'input window, operand 5, single buffered']
    #allocation10 [shape = 's32[1]{0}', space=sflag, size = 0x4, scoped, tag = 'scoped memory for contrastive_distortion.1']
    %13 = vsyncpa [#allocation5], 0
    %s14 = scalar_lea.sflag [#allocation5], 1
    %15 = vsyncpa %s14, 0
    %16 = vsyncpa [#allocation7], 0
    %s17 = scalar_lea.sflag [#allocation7], 1
    %18 = vsyncpa %s17, 0
    %19 = vsyncpa [#allocation10], 0
    loop: start=0, step=1, limit=6
    $region2: #{contrastive_distortion.1} parent=1 // loop_pre_header
      _
    $region3: #{contrastive_distortion.1} parent=1 // loop_header
      %s21 = sphi 0, %s25
      %p22 = scmp.ge.s32.totalorder %s21, 6
      %s31 = sphi 0, %s33
      %s34 = sphi 0, %s31
      %s35 = sphi 0, %s34
      %s51 = sphi 0, %s35
      %s57 = sphi 0, %s59
      %s60 = sphi 0, %s57
      %s61 = sphi 0, %s60
      %s77 = sphi 0, %s61
      %s81 = sphi 0, %s81
      %s83 = sphi 0, %s81
      %s84 = sphi 0, %s83
      %s98 = sphi 0, %s84
      %s102 = sphi 0, %s102
      %s104 = sphi 0, %s102
      %s105 = sphi 0, %s104
      %s119 = sphi 0, %s105
      %s123 = sphi 0, %s123
      %s125 = sphi 0, %s123
      %s126 = sphi 0, %s125
      %s140 = sphi 0, %s126
      %s144 = sphi 0, %s144
      %s146 = sphi 0, %s144
      %s147 = sphi 0, %s146
      %s161 = sphi 0, %s147
      %s167 = sphi 0, %s169
      %s170 = sphi 0, %s167
      %s171 = sphi 0, %s170
      %s187 = sphi 0, %s171
    $region4: #{contrastive_distortion.1} parent=1 // loop_header_branch
      %24 = sbr.rel (%p22) target = $region8
    $region5: #{contrastive_distortion.1} parent=1 // loop_body
      %s26 = ssub.s32 %s21, 1
      %s27 = ssub.s32 %s21, 2
      %s28 = sadd.s32 %s21, 1
      %s29 = ssub.s32 %s21, %s28
      %p30 = scmp.eq.s32.totalorder %s29, 0
      %s32 = sadd.s32 %s31, 1
      %s33 = scalar_select %p30, %s31, %s32
      %p36 = pneg %p30
      %p37 = scmp.eq.s32.totalorder %s21, 3
      %p38 = por %p36, %p37
      %p39 = scmp.ne.s32.totalorder %s31, %s34
      %p40 = scmp.eq.s32.totalorder %s21, 0
      %p41 = por %p39, %p40
      %p42 = scmp.ne.s32.totalorder %s31, %s34
      %p43 = scmp.eq.s32.totalorder %s26, 3
      %p44 = por %p42, %p43
      %p45 = scmp.ne.s32.totalorder %s34, %s35
      %p46 = scmp.eq.s32.totalorder %s26, 0
      %p47 = por %p45, %p46
      %p48 = scmp.ne.s32.totalorder %s34, %s35
      %p49 = scmp.eq.s32.totalorder %s27, 3
      %p50 = por %p48, %p49
      %p52 = scmp.ne.s32.totalorder %s35, %s51
      %p53 = scmp.eq.s32.totalorder %s27, 0
      %p54 = por %p52, %p53
      %s55 = ssub.s32 %s21, %s28
      %p56 = scmp.eq.s32.totalorder %s55, 0
      %s58 = sadd.s32 %s57, 1
      %s59 = scalar_select %p56, %s57, %s58
      %p62 = pneg %p56
      %p63 = scmp.eq.s32.totalorder %s21, 3
      %p64 = por %p62, %p63
      %p65 = scmp.ne.s32.totalorder %s57, %s60
      %p66 = scmp.eq.s32.totalorder %s21, 0
      %p67 = por %p65, %p66
      %p68 = scmp.ne.s32.totalorder %s57, %s60
      %p69 = scmp.eq.s32.totalorder %s26, 3
      %p70 = por %p68, %p69
      %p71 = scmp.ne.s32.totalorder %s60, %s61
      %p72 = scmp.eq.s32.totalorder %s26, 0
      %p73 = por %p71, %p72
      %p74 = scmp.ne.s32.totalorder %s60, %s61
      %p75 = scmp.eq.s32.totalorder %s27, 3
      %p76 = por %p74, %p75
      %p78 = scmp.ne.s32.totalorder %s61, %s77
      %p79 = scmp.eq.s32.totalorder %s27, 0
      %p80 = por %p78, %p79
      %s82 = sadd.s32 %s81, 1
      %p85 = scmp.eq.s32.totalorder %s21, 3
      %p86 = scmp.ne.s32.totalorder %s81, %s83
      %p87 = scmp.eq.s32.totalorder %s21, 0
      %p88 = por %p86, %p87
      %p89 = scmp.ne.s32.totalorder %s81, %s83
      %p90 = scmp.eq.s32.totalorder %s26, 3
      %p91 = por %p89, %p90
      %p92 = scmp.ne.s32.totalorder %s83, %s84
      %p93 = scmp.eq.s32.totalorder %s26, 0
      %p94 = por %p92, %p93
      %p95 = scmp.ne.s32.totalorder %s83, %s84
      %p96 = scmp.eq.s32.totalorder %s27, 3
      %p97 = por %p95, %p96
      %p99 = scmp.ne.s32.totalorder %s84, %s98
      %p100 = scmp.eq.s32.totalorder %s27, 0
      %p101 = por %p99, %p100
      %s103 = sadd.s32 %s102, 1
      %p106 = scmp.eq.s32.totalorder %s21, 3
      %p107 = scmp.ne.s32.totalorder %s102, %s104
      %p108 = scmp.eq.s32.totalorder %s21, 0
      %p109 = por %p107, %p108
      %p110 = scmp.ne.s32.totalorder %s102, %s104
      %p111 = scmp.eq.s32.totalorder %s26, 3
      %p112 = por %p110, %p111
      %p113 = scmp.ne.s32.totalorder %s104, %s105
      %p114 = scmp.eq.s32.totalorder %s26, 0
      %p115 = por %p113, %p114
      %p116 = scmp.ne.s32.totalorder %s104, %s105
      %p117 = scmp.eq.s32.totalorder %s27, 3
      %p118 = por %p116, %p117
      %p120 = scmp.ne.s32.totalorder %s105, %s119
      %p121 = scmp.eq.s32.totalorder %s27, 0
      %p122 = por %p120, %p121
      %s124 = sadd.s32 %s123, 1
      %p127 = scmp.eq.s32.totalorder %s21, 3
      %p128 = scmp.ne.s32.totalorder %s123, %s125
      %p129 = scmp.eq.s32.totalorder %s21, 0
      %p130 = por %p128, %p129
      %p131 = scmp.ne.s32.totalorder %s123, %s125
      %p132 = scmp.eq.s32.totalorder %s26, 3
      %p133 = por %p131, %p132
      %p134 = scmp.ne.s32.totalorder %s125, %s126
      %p135 = scmp.eq.s32.totalorder %s26, 0
      %p136 = por %p134, %p135
      %p137 = scmp.ne.s32.totalorder %s125, %s126
      %p138 = scmp.eq.s32.totalorder %s27, 3
      %p139 = por %p137, %p138
      %p141 = scmp.ne.s32.totalorder %s126, %s140
      %p142 = scmp.eq.s32.totalorder %s27, 0
      %p143 = por %p141, %p142
      %s145 = sadd.s32 %s144, 1
      %p148 = scmp.eq.s32.totalorder %s21, 3
      %p149 = scmp.ne.s32.totalorder %s144, %s146
      %p150 = scmp.eq.s32.totalorder %s21, 0
      %p151 = por %p149, %p150
      %p152 = scmp.ne.s32.totalorder %s144, %s146
      %p153 = scmp.eq.s32.totalorder %s26, 3
      %p154 = por %p152, %p153
      %p155 = scmp.ne.s32.totalorder %s146, %s147
      %p156 = scmp.eq.s32.totalorder %s26, 0
      %p157 = por %p155, %p156
      %p158 = scmp.ne.s32.totalorder %s146, %s147
      %p159 = scmp.eq.s32.totalorder %s27, 3
      %p160 = por %p158, %p159
      %p162 = scmp.ne.s32.totalorder %s147, %s161
      %p163 = scmp.eq.s32.totalorder %s27, 0
      %p164 = por %p162, %p163
      %s165 = ssub.s32 %s21, %s28
      %p166 = scmp.eq.s32.totalorder %s165, 0
      %s168 = sadd.s32 %s167, 1
      %s169 = scalar_select %p166, %s167, %s168
      %p172 = pneg %p166
      %p173 = scmp.eq.s32.totalorder %s21, 3
      %p174 = por %p172, %p173
      %p175 = scmp.ne.s32.totalorder %s167, %s170
      %p176 = scmp.eq.s32.totalorder %s21, 0
      %p177 = por %p175, %p176
      %p178 = scmp.ne.s32.totalorder %s167, %s170
      %p179 = scmp.eq.s32.totalorder %s26, 3
      %p180 = por %p178, %p179
      %p181 = scmp.ne.s32.totalorder %s170, %s171
      %p182 = scmp.eq.s32.totalorder %s26, 0
      %p183 = por %p181, %p182
      %p184 = scmp.ne.s32.totalorder %s170, %s171
      %p185 = scmp.eq.s32.totalorder %s27, 3
      %p186 = por %p184, %p185
      %p188 = scmp.ne.s32.totalorder %s171, %s187
      %p189 = scmp.eq.s32.totalorder %s27, 0
      %p190 = por %p188, %p189
      %p191 = scmp.le.s32.totalorder 1, %s21
      %p192 = scmp.lt.s32.totalorder %s21, 5
      %p193 = pnand %p191, %p192
      %p194 = pneg %p193
      // Predicated region
      $region9: #{contrastive_distortion.1} parent=5 // pred_check
        _
      $region10: #{contrastive_distortion.1} parent=5 // pred_check_branch
        %196 = sbr.rel (%p193) target = $region12
      $region11: #{contrastive_distortion.1} parent=5 // pred_region
        %s197 = ssub.s32 %s21, 1
        // Predicated region
        $region13: #{contrastive_distortion.1} parent=11 // pred_check
          %p198 = pneg %p94
        $region14: #{contrastive_distortion.1} parent=11 // pred_check_branch
          %200 = sbr.rel (%p198) target = $region16
        $region15: #{contrastive_distortion.1} parent=11 // pred_region
          %202 = vsyncadd [#allocation7], 0
          %s203 = sshll.u32 %s3, 4
          %s204 = int_to_ptr.hbm [resolvable:$true] %s203
          %s205 = sshll.u32 [#allocation8], 4
          %s206 = int_to_ptr.vmem [resolvable:$true] %s205
          %211 = dma.hbm_to_vmem [thread:$0]  %s204, 2048, %s206, [#allocation7], 128, 128, 8
        $region16: #{contrastive_distortion.1} parent=11 // pred_fallthru
          _
        // Predicated region
        $region17: #{contrastive_distortion.1} parent=11 // pred_check
          %p212 = pneg %p115
        $region18: #{contrastive_distortion.1} parent=11 // pred_check_branch
          %214 = sbr.rel (%p212) target = $region20
        $region19: #{contrastive_distortion.1} parent=11 // pred_region
          _
        $region20: #{contrastive_distortion.1} parent=11 // pred_fallthru
          _
        // Predicated region
        $region21: #{contrastive_distortion.1} parent=11 // pred_check
          %p215 = pneg %p136
        $region22: #{contrastive_distortion.1} parent=11 // pred_check_branch
          %217 = sbr.rel (%p215) target = $region24
        $region23: #{contrastive_distortion.1} parent=11 // pred_region
          %219 = vsyncadd [#allocation10], 0
          %s220 = sshll.u32 %s5, 4
          %s221 = int_to_ptr.hbm [resolvable:$true] %s220
          %s222 = sshll.u32 [#allocation9], 4
          %s223 = int_to_ptr.vmem [resolvable:$true] %s222
          %228 = dma.hbm_to_vmem [thread:$0]  %s221, 2048, %s223, [#allocation10], 128, 128, 8
        $region24: #{contrastive_distortion.1} parent=11 // pred_fallthru
          _
        // Predicated region
        $region25: #{contrastive_distortion.1} parent=11 // pred_check
          %p229 = pneg %p157
        $region26: #{contrastive_distortion.1} parent=11 // pred_check_branch
          %231 = sbr.rel (%p229) target = $region28
        $region27: #{contrastive_distortion.1} parent=11 // pred_region
          _
        $region28: #{contrastive_distortion.1} parent=11 // pred_fallthru
          _
      $region12: #{contrastive_distortion.1} parent=5 // pred_fallthru
        _
      %p232 = scmp.lt.s32.totalorder %s21, 4
      // Predicated region
      $region29: #{contrastive_distortion.1} parent=5 // pred_check
        %p233 = pneg %p232
      $region30: #{contrastive_distortion.1} parent=5 // pred_check_branch
        %235 = sbr.rel (%p233) target = $region32
      $region31: #{contrastive_distortion.1} parent=5 // pred_region
        // Predicated region
        $region33: #{contrastive_distortion.1} parent=31 // pred_check
          %p236 = pneg %p41
        $region34: #{contrastive_distortion.1} parent=31 // pred_check_branch
          %238 = sbr.rel (%p236) target = $region36
        $region35: #{contrastive_distortion.1} parent=31 // pred_region
          %s239 = sand.u32 %s31, 1
          %s240 = scalar_lea.sflag [#allocation5], %s239
          %s241 = sand.u32 %s31, 1
          %s242 = smul.addr %s241, 16
          %s243 = scalar_lea.vmem [#allocation4], %s242
          %s244 = smul.u32 2, %s21
          %246 = vsyncadd %s240, 0
          %s247 = smul.addr %s244, 8
          %s248 = scalar_lea.hbm %s1, %s247
          %s249 = sshll.u32 %s248, 4
          %s250 = int_to_ptr.hbm [resolvable:$true] %s249
          %s251 = sshll.u32 %s243, 4
          %s252 = int_to_ptr.vmem [resolvable:$true] %s251
          %257 = dma.hbm_to_vmem [thread:$0]  %s250, 256, %s252, %s240, 128, 128, 8
        $region36: #{contrastive_distortion.1} parent=31 // pred_fallthru
          _
        // Predicated region
        $region37: #{contrastive_distortion.1} parent=31 // pred_check
          %p258 = pneg %p67
        $region38: #{contrastive_distortion.1} parent=31 // pred_check_branch
          %260 = sbr.rel (%p258) target = $region40
        $region39: #{contrastive_distortion.1} parent=31 // pred_region
          %s261 = sand.u32 %s21, 1
          %s262 = scalar_lea.sflag [#allocation7], %s261
          %s263 = sand.u32 %s57, 1
          %s264 = smul.addr %s263, 16
          %s265 = scalar_lea.vmem [#allocation6], %s264
          %s266 = smul.u32 2, %s21
          %268 = vsyncadd %s262, 0
          %s269 = smul.addr %s266, 8
          %s270 = scalar_lea.hbm %s2, %s269
          %s271 = sshll.u32 %s270, 4
          %s272 = int_to_ptr.hbm [resolvable:$true] %s271
          %s273 = sshll.u32 %s265, 4
          %s274 = int_to_ptr.vmem [resolvable:$true] %s273
          %279 = dma.hbm_to_vmem [thread:$0]  %s272, 256, %s274, %s262, 128, 128, 8
        $region40: #{contrastive_distortion.1} parent=31 // pred_fallthru
          _
      $region32: #{contrastive_distortion.1} parent=5 // pred_fallthru
        _
      %p280 = scmp.le.s32.totalorder 1, %s21
      %p281 = scmp.lt.s32.totalorder %s21, 5
      %p282 = pnand %p280, %p281
      %p283 = pneg %p282
      // Predicated region
      $region41: #{contrastive_distortion.1} parent=5 // pred_check
        _
      $region42: #{contrastive_distortion.1} parent=5 // pred_check_branch
        %285 = sbr.rel (%p282) target = $region44
      $region43: #{contrastive_distortion.1} parent=5 // pred_region
        %s286 = ssub.s32 %s21, 1
        %s287 = sand.u32 %s34, 1
        %s288 = scalar_lea.sflag [#allocation5], %s287
        %s289 = sand.u32 %s34, 1
        %s290 = smul.addr %s289, 16
        %s291 = scalar_lea.vmem [#allocation4], %s290
        // Predicated region
        $region45: #{contrastive_distortion.1} parent=43 // pred_check
          %p292 = pneg %p47
        $region46: #{contrastive_distortion.1} parent=43 // pred_check_branch
          %294 = sbr.rel (%p292) target = $region48
        $region47: #{contrastive_distortion.1} parent=43 // pred_region
          %296 = dma.done %s288, 256
        $region48: #{contrastive_distortion.1} parent=43 // pred_fallthru
          _
        %s297 = sand.u32 %s26, 1
        %s298 = scalar_lea.sflag [#allocation7], %s297
        %s299 = sand.u32 %s60, 1
        %s300 = smul.addr %s299, 16
        %s301 = scalar_lea.vmem [#allocation6], %s300
        // Predicated region
        $region49: #{contrastive_distortion.1} parent=43 // pred_check
          %p302 = pneg %p73
        $region50: #{contrastive_distortion.1} parent=43 // pred_check_branch
          %304 = sbr.rel (%p302) target = $region52
        $region51: #{contrastive_distortion.1} parent=43 // pred_region
          %306 = dma.done %s298, 256
        $region52: #{contrastive_distortion.1} parent=43 // pred_fallthru
          _
        // Predicated region
        $region53: #{contrastive_distortion.1} parent=43 // pred_check
          %p307 = pneg %p94
        $region54: #{contrastive_distortion.1} parent=43 // pred_check_branch
          %309 = sbr.rel (%p307) target = $region56
        $region55: #{contrastive_distortion.1} parent=43 // pred_region
          %311 = dma.done [#allocation7], 2048
        $region56: #{contrastive_distortion.1} parent=43 // pred_fallthru
          _
        // Predicated region
        $region57: #{contrastive_distortion.1} parent=43 // pred_check
          %p312 = pneg %p136
        $region58: #{contrastive_distortion.1} parent=43 // pred_check_branch
          %314 = sbr.rel (%p312) target = $region60
        $region59: #{contrastive_distortion.1} parent=43 // pred_region
          %316 = dma.done [#allocation10], 2048
        $region60: #{contrastive_distortion.1} parent=43 // pred_fallthru
          _
        %s317 = sand.u32 %s34, 1
        %s318 = scalar_lea.sflag [#allocation5], %s317
        %s319 = sand.u32 %s34, 1
        %s320 = smul.addr %s319, 16
        %s321 = scalar_lea.vmem [#allocation4], %s320
        %p322 = pneg %p47
        %p323 = pneg %p44
        %s324 = sand.u32 %s26, 1
        %s325 = scalar_lea.sflag [#allocation7], %s324
        %s326 = sand.u32 %s60, 1
        %s327 = smul.addr %s326, 16
        %s328 = scalar_lea.vmem [#allocation6], %s327
        %p329 = pneg %p73
        %p330 = pneg %p70
        %p331 = pneg %p94
        %p332 = pneg %p91
        %p333 = pneg %p115
        %p334 = pneg %p112
        %p335 = pneg %p136
        %p336 = pneg %p133
        %p337 = pneg %p157
        %p338 = pneg %p154
        %p339 = pneg %p183
        %p340 = pneg %p180
        %s341 = smul.u32 2, %s26
        %p342 = scmp.lt.s32.totalorder %s341, 7
        %s343 = scalar_select %p342, %s341, 7
        %s344 = scalar_lea.vmem %s7, %s343
        %s345 = smul.u32 2, %s26
        %s346 = smul.u32 2, %s26
        %s347 = smul.u32 2, %s26
        %p348 = scmp.lt.s32.totalorder %s347, 7
        %s349 = scalar_select %p348, %s347, 7
        %s350 = scalar_lea.vmem %s7, %s349
        %s351 = smul.u32 2, %s26
        %s352 = sld [smem:[#allocation3]]
        %v353 = vld [vmem:[%s291] sm:$0xff]
        %v354 = vld [vmem:[%s291 + $0x8] sm:$0xff]
        %v355 = vld [vmem:[%s301] sm:$0xff]
        %v356 = vld [vmem:[%s301 + $0x8] sm:$0xff]
        %v357 = vld [vmem:[#allocation8] sm:$0xff]
        %v358 = vld [vmem:[#allocation8 + $0x8] sm:$0xff]
        %v359 = vld [vmem:[#allocation8 + $0x10] sm:$0xff]
        %v360 = vld [vmem:[#allocation8 + $0x18] sm:$0xff]
        %v361 = vld [vmem:[#allocation8 + $0x20] sm:$0xff]
        %v362 = vld [vmem:[#allocation8 + $0x28] sm:$0xff]
        %v363 = vld [vmem:[#allocation8 + $0x30] sm:$0xff]
        %v364 = vld [vmem:[#allocation8 + $0x38] sm:$0xff]
        %v365 = vld [vmem:[#allocation8 + $0x40] sm:$0xff]
        %v366 = vld [vmem:[#allocation8 + $0x48] sm:$0xff]
        %v367 = vld [vmem:[#allocation8 + $0x50] sm:$0xff]
        %v368 = vld [vmem:[#allocation8 + $0x58] sm:$0xff]
        %v369 = vld [vmem:[#allocation8 + $0x60] sm:$0xff]
        %v370 = vld [vmem:[#allocation8 + $0x68] sm:$0xff]
        %v371 = vld [vmem:[#allocation8 + $0x70] sm:$0xff]
        %v372 = vld [vmem:[#allocation8 + $0x78] sm:$0xff]
        %v373 = vld [vmem:[#allocation9] sm:$0xff]
        %v374 = vld [vmem:[#allocation9 + $0x8] sm:$0xff]
        %v375 = vld [vmem:[#allocation9 + $0x10] sm:$0xff]
        %v376 = vld [vmem:[#allocation9 + $0x18] sm:$0xff]
        %v377 = vld [vmem:[#allocation9 + $0x20] sm:$0xff]
        %v378 = vld [vmem:[#allocation9 + $0x28] sm:$0xff]
        %v379 = vld [vmem:[#allocation9 + $0x30] sm:$0xff]
        %v380 = vld [vmem:[#allocation9 + $0x38] sm:$0xff]
        %v381 = vld [vmem:[#allocation9 + $0x40] sm:$0xff]
        %v382 = vld [vmem:[#allocation9 + $0x48] sm:$0xff]
        %v383 = vld [vmem:[#allocation9 + $0x50] sm:$0xff]
        %v384 = vld [vmem:[#allocation9 + $0x58] sm:$0xff]
        %v385 = vld [vmem:[#allocation9 + $0x60] sm:$0xff]
        %v386 = vld [vmem:[#allocation9 + $0x68] sm:$0xff]
        %v387 = vld [vmem:[#allocation9 + $0x70] sm:$0xff]
        %v388 = vld [vmem:[#allocation9 + $0x78] sm:$0xff]
        %v389 = vld [vmem:[%s4] sm:$0x1]
        %v391 = vperm.slane %v389, 0
        %393 = vmatpush.msra.mxu0 %v372
        %394 = vmatpush.msra.mxu0 %v371
        %395 = vmatpush.msra.mxu0 %v370
        %396 = vmatpush.msra.mxu0 %v369
        %397 = vmatpush.msra.mxu0 %v368
        %398 = vmatpush.msra.mxu0 %v367
        %399 = vmatpush.msra.mxu0 %v366
        %400 = vmatpush.msra.mxu0 %v365
        %401 = vmatpush.msra.mxu0 %v364
        %402 = vmatpush.msra.mxu0 %v363
        %403 = vmatpush.msra.mxu0 %v362
        %404 = vmatpush.msra.mxu0 %v361
        %405 = vmatpush.msra.mxu0 %v360
        %406 = vmatpush.msra.mxu0 %v359
        %407 = vmatpush.msra.mxu0 %v358
        %408 = vmatpush.msra.mxu0 %v357
        %409 = vmatmul.f32.gmra.mxu0 %v353
        %v410 = vpop.f32.mrf.mxu0
        %v411 = vadd.f32 %v391, %v410
        %412 = vmatmul.f32.gmra.mxu0 %v355
        %v413 = vpop.f32.mrf.mxu0
        %v414 = vadd.f32 %v391, %v413
        %415 = vmatmul.f32.gmra.mxu0 %v354
        %v416 = vpop.f32.mrf.mxu0
        %v417 = vadd.f32 %v391, %v416
        %418 = vmatmul.f32.gmra.mxu0 %v356
        %v419 = vpop.f32.mrf.mxu0
        %v420 = vadd.f32 %v391, %v419
        %421 = vdwg.mxu0
        %v422 = vmax.f32 %v411, 0.0
        %v423 = vmax.f32 %v414, 0.0
        %v424 = vmax.f32 %v417, 0.0
        %v425 = vmax.f32 %v420, 0.0
        %v426 = vld [vmem:[%s6] sm:$0x1]
        %v428 = vperm.slane %v426, 0
        %430 = vmatpush.msra.mxu0 %v388
        %431 = vmatpush.msra.mxu0 %v387
        %432 = vmatpush.msra.mxu0 %v386
        %433 = vmatpush.msra.mxu0 %v385
        %434 = vmatpush.msra.mxu0 %v384
        %435 = vmatpush.msra.mxu0 %v383
        %436 = vmatpush.msra.mxu0 %v382
        %437 = vmatpush.msra.mxu0 %v381
        %438 = vmatpush.msra.mxu0 %v380
        %439 = vmatpush.msra.mxu0 %v379
        %440 = vmatpush.msra.mxu0 %v378
        %441 = vmatpush.msra.mxu0 %v377
        %442 = vmatpush.msra.mxu0 %v376
        %443 = vmatpush.msra.mxu0 %v375
        %444 = vmatpush.msra.mxu0 %v374
        %445 = vmatpush.msra.mxu0 %v373
        %446 = vmatmul.f32.gmra.mxu0 %v422
        %v447 = vpop.f32.mrf.mxu0
        %v448 = vadd.f32 %v428, %v447
        %449 = vmatmul.f32.gmra.mxu0 %v423
        %v450 = vpop.f32.mrf.mxu0
        %v451 = vadd.f32 %v428, %v450
        %452 = vmatmul.f32.gmra.mxu0 %v424
        %v453 = vpop.f32.mrf.mxu0
        %v454 = vadd.f32 %v428, %v453
        %455 = vmatmul.f32.gmra.mxu0 %v425
        %v456 = vpop.f32.mrf.mxu0
        %v457 = vadd.f32 %v428, %v456
        %458 = vdwg.mxu0
        %v459 = vmul.f32 %v448, %v448
        %v460 = vmul.f32 %v451, %v451
        %v461 = vmul.f32 %v454, %v454
        %v462 = vmul.f32 %v457, %v457
        %463 = vadd.xlane.f32.xlu0 %v459
        %v464 = vpop.xlane.xlu0 %463
        %465 = vadd.xlane.f32.xlu0 %v460
        %v466 = vpop.xlane.xlu0 %465
        %467 = vadd.xlane.f32.xlu0 %v461
        %v468 = vpop.xlane.xlu0 %467
        %469 = vadd.xlane.f32.xlu0 %v462
        %v470 = vpop.xlane.xlu0 %469
        %v471 = vstv %s352
        %v472 = vrsqrt.pop %v471
        %v473 = vmul.f32 %v472, %v471
        %v474 = vmul.f32 %v473, %v472
        %v475 = vmul.f32 0.5, %v474
        %v476 = vsub.f32 1.5, %v475
        %v477 = vmul.f32 %v472, %v476
        %v478 = vmul.f32 %v471, %v477
        %vm479 = vcmp.eq.f32.partialorder %v471, inf
        %v480 = vsel %vm479, %v471, %v478
        %vm481 = vcmp.eq.f32.partialorder %v471, 0.0
        %v482 = vand.u32 %v471, 2147483648
        %v483 = vsel %vm481, %v482, %v480
        %s484 = vtos %v483
        %v485 = vmax.f32 %v464, 1e-24
        %v486 = vmax.f32 %v466, 1e-24
        %v487 = vmax.f32 %v468, 1e-24
        %v488 = vmax.f32 %v470, 1e-24
        %v489 = vrsqrt.pop %v485
        %v490 = vmul.f32 %v489, %v485
        %v491 = vmul.f32 %v490, %v489
        %v492 = vmul.f32 0.5, %v491
        %v493 = vsub.f32 1.5, %v492
        %v494 = vmul.f32 %v489, %v493
        %vm495 = vweird.f32 %v485
        %vm496 = vweird.f32 %v489
        %vm497 = vmor %vm495, %vm496
        %v498 = vsel %vm497, %v489, %v494
        %v499 = vrsqrt.pop %v486
        %v500 = vmul.f32 %v499, %v486
        %v501 = vmul.f32 %v500, %v499
        %v502 = vmul.f32 0.5, %v501
        %v503 = vsub.f32 1.5, %v502
        %v504 = vmul.f32 %v499, %v503
        %vm505 = vweird.f32 %v486
        %vm506 = vweird.f32 %v499
        %vm507 = vmor %vm505, %vm506
        %v508 = vsel %vm507, %v499, %v504
        %v509 = vrsqrt.pop %v487
        %v510 = vmul.f32 %v509, %v487
        %v511 = vmul.f32 %v510, %v509
        %v512 = vmul.f32 0.5, %v511
        %v513 = vsub.f32 1.5, %v512
        %v514 = vmul.f32 %v509, %v513
        %vm515 = vweird.f32 %v487
        %vm516 = vweird.f32 %v509
        %vm517 = vmor %vm515, %vm516
        %v518 = vsel %vm517, %v509, %v514
        %v519 = vrsqrt.pop %v488
        %v520 = vmul.f32 %v519, %v488
        %v521 = vmul.f32 %v520, %v519
        %v522 = vmul.f32 0.5, %v521
        %v523 = vsub.f32 1.5, %v522
        %v524 = vmul.f32 %v519, %v523
        %vm525 = vweird.f32 %v488
        %vm526 = vweird.f32 %v519
        %vm527 = vmor %vm525, %vm526
        %v528 = vsel %vm527, %v519, %v524
        %v529 = vstv %s484
        %v530 = vmul.f32 %v529, %v498
        %v531 = vmul.f32 %v529, %v508
        %v532 = vmul.f32 %v529, %v518
        %v533 = vmul.f32 %v529, %v528
        %v534 = vmul.f32 %v448, %v530
        %v535 = vmul.f32 %v451, %v531
        %v536 = vmul.f32 %v454, %v532
        %v537 = vmul.f32 %v457, %v533
        %v538 = vmul.f32 %v534, %v535
        %v539 = vmul.f32 %v536, %v537
        %540 = vadd.xlane.f32.xlu0 %v538
        %v541 = vpop.xlane.xlu0 %540
        %542 = vadd.xlane.f32.xlu0 %v539
        %v543 = vpop.xlane.xlu0 %542
        %v544 = vmul.f32 %v534, %v534
        %v545 = vmul.f32 %v535, %v535
        %v546 = vmul.f32 %v536, %v536
        %v547 = vmul.f32 %v537, %v537
        %548 = vadd.xlane.f32.xlu0 %v544
        %v549 = vpop.xlane.xlu0 %548
        %550 = vadd.xlane.f32.xlu0 %v545
        %v551 = vpop.xlane.xlu0 %550
        %552 = vadd.xlane.f32.xlu0 %v546
        %v553 = vpop.xlane.xlu0 %552
        %554 = vadd.xlane.f32.xlu0 %v547
        %v555 = vpop.xlane.xlu0 %554
        %556 = vmatpush.xpose.msra.mxu0 0.0
        %557 = vmatpush.xpose.msra.mxu0 0.0
        %558 = vmatpush.xpose.msra.mxu0 0.0
        %559 = vmatpush.xpose.msra.mxu0 0.0
        %560 = vmatpush.xpose.msra.mxu0 0.0
        %561 = vmatpush.xpose.msra.mxu0 0.0
        %562 = vmatpush.xpose.msra.mxu0 0.0
        %563 = vmatpush.xpose.msra.mxu0 0.0
        %564 = vmatpush.xpose.msra.mxu0 0.0
        %565 = vmatpush.xpose.msra.mxu0 0.0
        %566 = vmatpush.xpose.msra.mxu0 0.0
        %567 = vmatpush.xpose.msra.mxu0 0.0
        %568 = vmatpush.xpose.msra.mxu0 0.0
        %569 = vmatpush.xpose.msra.mxu0 0.0
        %570 = vmatpush.xpose.msra.mxu0 %v535
        %571 = vmatpush.xpose.msra.mxu0 %v534
        %572 = vmatmul.f32.gmra.mxu0 %v534
        %v573 = vpop.f32.mrf.mxu0
        %v574 = vadd.f32 0.0, %v573
        %575 = vmatmul.f32.gmra.mxu0 %v535
        %v576 = vpop.f32.mrf.mxu0
        %v577 = vadd.f32 0.0, %v576
        %578 = vdwg.mxu0
        %579 = vmatpush.xpose.msra.mxu0 0.0
        %580 = vmatpush.xpose.msra.mxu0 0.0
        %581 = vmatpush.xpose.msra.mxu0 0.0
        %582 = vmatpush.xpose.msra.mxu0 0.0
        %583 = vmatpush.xpose.msra.mxu0 0.0
        %584 = vmatpush.xpose.msra.mxu0 0.0
        %585 = vmatpush.xpose.msra.mxu0 0.0
        %586 = vmatpush.xpose.msra.mxu0 0.0
        %587 = vmatpush.xpose.msra.mxu0 0.0
        %588 = vmatpush.xpose.msra.mxu0 0.0
        %589 = vmatpush.xpose.msra.mxu0 0.0
        %590 = vmatpush.xpose.msra.mxu0 0.0
        %591 = vmatpush.xpose.msra.mxu0 0.0
        %592 = vmatpush.xpose.msra.mxu0 0.0
        %593 = vmatpush.xpose.msra.mxu0 %v537
        %594 = vmatpush.xpose.msra.mxu0 %v536
        %595 = vmatmul.f32.gmra.mxu0 %v536
        %v596 = vpop.f32.mrf.mxu0
        %v597 = vadd.f32 0.0, %v596
        %598 = vmatmul.f32.gmra.mxu0 %v537
        %v599 = vpop.f32.mrf.mxu0
        %v600 = vadd.f32 0.0, %v599
        %601 = vdwg.mxu0
        %v602 = vstv %s352
        %v603 = vsub.f32 %v574, %v602
        %v604 = vsub.f32 %v577, %v602
        %v605 = vsub.f32 %v597, %v602
        %v606 = vsub.f32 %v600, %v602
        %v607 = vmul.f32 %v603, 1.442695
        %v608 = vpow.pop %v607
        %v609 = vmul.f32 %v604, 1.442695
        %v610 = vpow.pop %v609
        %v611 = vmul.f32 %v605, 1.442695
        %v612 = vpow.pop %v611
        %v613 = vmul.f32 %v606, 1.442695
        %v614 = vpow.pop %v613
        %vm615 = vcmask 130048
        %v616 = vsel %vm615, %v608, 0.0
        %617 = vadd.xlane.f32.xlu0 %v616
        %v618 = vpop.xlane.xlu0 %617
        %v619 = vsel %vm615, %v610, 0.0
        %620 = vadd.xlane.f32.xlu0 %v619
        %v621 = vpop.xlane.xlu0 %620
        %v622 = vsel %vm615, %v612, 0.0
        %623 = vadd.xlane.f32.xlu0 %v622
        %v624 = vpop.xlane.xlu0 %623
        %v625 = vsel %vm615, %v614, 0.0
        %626 = vadd.xlane.f32.xlu0 %v625
        %v627 = vpop.xlane.xlu0 %626
        %v628 = vsub.f32 %v549, %v602
        %v629 = vsub.f32 %v551, %v602
        %v630 = vsub.f32 %v553, %v602
        %v631 = vsub.f32 %v555, %v602
        %v632 = vmul.f32 %v628, 1.442695
        %v633 = vpow.pop %v632
        %v634 = vmul.f32 %v629, 1.442695
        %v635 = vpow.pop %v634
        %v636 = vmul.f32 %v630, 1.442695
        %v637 = vpow.pop %v636
        %v638 = vmul.f32 %v631, 1.442695
        %v639 = vpow.pop %v638
        %v640 = vsub.f32 %v618, %v633
        %v641 = vsub.f32 %v621, %v635
        %v642 = vsub.f32 %v624, %v637
        %v643 = vsub.f32 %v627, %v639
        %v644 = vmax.f32 %v640, 1e-30
        %v645 = vmax.f32 %v641, 1e-30
        %v646 = vmax.f32 %v642, 1e-30
        %v647 = vmax.f32 %v643, 1e-30
        %v648 = vlog2.pop %v644
        %v649 = vmul.f32 %v648, 0.6931472
        %v650 = vlog2.pop %v645
        %v651 = vmul.f32 %v650, 0.6931472
        %v652 = vlog2.pop %v646
        %v653 = vmul.f32 %v652, 0.6931472
        %v654 = vlog2.pop %v647
        %v655 = vmul.f32 %v654, 0.6931472
        %v656 = vadd.f32 %v602, %v649
        %v657 = vadd.f32 %v602, %v651
        %v658 = vadd.f32 %v602, %v653
        %v659 = vadd.f32 %v602, %v655
        %v660 = vadd.f32 %v656, %v657
        %v661 = vadd.f32 %v658, %v659
        %v662 = vmul.f32 %v660, 0.5
        %v663 = vmul.f32 %v661, 0.5
        %v664 = vsub.f32 %v662, %v541
        %v665 = vsub.f32 %v663, %v543
        %v668 = vlaneseq
        %v669 = vand.u32 %v668, 127
        %v670 = vperm.slane %v664, %v669
        %v671 = vperm.slane %v665, %v669
        %vm674 = vcmask 57344
        %675 = vst.msk [vmem:[%s350] sm:$0x1] %vm674, %v670
        %676 = vst.msk [vmem:[%s350 + $0x1] sm:$0x1] %vm674, %v671
        %s677 = smul.u32 2, %s26
        %p678 = scmp.lt.s32.totalorder %s677, 7
        %s679 = scalar_select %p678, %s677, 7
        %s680 = scalar_lea.vmem %s7, %s679
        // Predicated region
        $region61: #{contrastive_distortion.1} parent=43 // pred_check
          %p681 = pneg %p180
        $region62: #{contrastive_distortion.1} parent=43 // pred_check_branch
          %683 = sbr.rel (%p681) target = $region64
        $region63: #{contrastive_distortion.1} parent=43 // pred_region
          %s684 = smul.u32 2, %s26
        $region64: #{contrastive_distortion.1} parent=43 // pred_fallthru
          _
      $region44: #{contrastive_distortion.1} parent=5 // pred_fallthru
        _
      %p685 = scmp.le.s32.totalorder 2, %s21
      // Predicated region
      $region65: #{contrastive_distortion.1} parent=5 // pred_check
        %p686 = pneg %p685
      $region66: #{contrastive_distortion.1} parent=5 // pred_check_branch
        %688 = sbr.rel (%p686) target = $region68
      $region67: #{contrastive_distortion.1} parent=5 // pred_region
        %s689 = ssub.s32 %s21, 2
        // Predicated region
        $region69: #{contrastive_distortion.1} parent=67 // pred_check
          %p690 = pneg %p186
        $region70: #{contrastive_distortion.1} parent=67 // pred_check_branch
          %692 = sbr.rel (%p690) target = $region72
        $region71: #{contrastive_distortion.1} parent=67 // pred_region
          %s693 = smul.u32 2, %s27
          %p694 = scmp.lt.s32.totalorder %s693, 7
          %s695 = scalar_select %p694, %s693, 7
          %s696 = scalar_lea.vmem %s7, %s695
        $region72: #{contrastive_distortion.1} parent=67 // pred_fallthru
          _
      $region68: #{contrastive_distortion.1} parent=5 // pred_fallthru
        _
    $region6: #{contrastive_distortion.1} parent=1 // loop_footer
      %s25 = sadd.s32 1, %s21
    $region7: #{contrastive_distortion.1} parent=1 // loop_footer_branch
      %20 = sbr.rel target = $region3
    $region8: #{contrastive_distortion.1} parent=1 // loop_exit
      _
    %697 = vsyncpa [#allocation5], 1
    %s698 = scalar_lea.sflag [#allocation5], 1
    %699 = vsyncpa %s698, 1
    %700 = vsyncpa [#allocation7], 1
    %s701 = scalar_lea.sflag [#allocation7], 1
    %702 = vsyncpa %s701, 1
    %703 = vsyncpa [#allocation10], 1

</llo_original>
